<compile_context>
chip_gen: v6e
topology: v6e:2x2x1
jax: 0.10.0
libtpu: 0.0.40
codegen_flags: <defaults>
</compile_context>

<pallas_src>
import functools

import numpy as np
import jax
import jax.numpy as jnp
from jax import lax
from jax.experimental import pallas as pl
from jax.experimental.pallas import tpu as pltpu

PRIMITIVES = ['none', 'max_pool_3x3', 'avg_pool_3x3', 'skip_connect',
              'sep_conv_3x3', 'sep_conv_5x5', 'dil_conv_3x3', 'dil_conv_5x5']


# ----------------------------------------------------------------------------
# Static plan: mirror of the PyTorch forward loop -> per-step (state_idx, primitive)
# ----------------------------------------------------------------------------
def build_plan(cell_arch, steps):
    arch = {int(b): PRIMITIVES[int(p)] for b, p in cell_arch}
    plan = []
    offset = 0
    n_states = 2
    for _ in range(steps):
        step_ops = []
        for j in range(n_states):
            if (offset + j) in arch:
                step_ops.append((j, arch[offset + j]))
        plan.append(step_ops)
        offset += n_states
        n_states += 1
    return plan


# ----------------------------------------------------------------------------
# Trace-time (numpy) pooling metadata, packed into one (9*C, N*H*W) f32 slab.
#   rows [k*C:(k+1)*C] for k = 0..8:
#     0..3 : additive masks for max-pool (0 where the L/R/U/D neighbour is valid,
#            -inf where it falls outside the 3x3 window / outside the sample)
#     4..7 : multiplicative masks for avg-pool (1 valid / 0 invalid), same order
#     8    : 1 / (valid window count)  (count_include_pad=False denominators)
# ----------------------------------------------------------------------------
def build_pool_meta(n, c, h, w):
    hw = h * w
    nhw = n * hw
    col = np.arange(nhw)
    wi = col % w                 # column within the sample row
    hi = (col // w) % h          # row within the sample
    has = [wi >= 1, wi <= w - 2, hi >= 1, hi <= h - 2]          # L, R, U, D
    neg = np.where(np.asarray(has), 0.0, -np.inf).astype(np.float32)   # (4, nhw)
    one = np.asarray(has, dtype=np.float32)                             # (4, nhw)
    cnt = (1.0 + one[0] + one[1]) * (1.0 + one[2] + one[3])
    inv = (1.0 / cnt).astype(np.float32)[None, :]                       # (1, nhw)
    rows = np.concatenate([neg, one, inv], axis=0)                      # (9, nhw)
    return np.repeat(rows, c, axis=0).astype(np.float32)                # (9c, nhw)


# ----------------------------------------------------------------------------
# Fused kernel: [ReLU -> merged 1x1 conv -> BN]  ->  cell DAG  ->  slab stores.
# All states are (C_out, N*H*W) f32 slabs (channels on sublanes, batch*spatial in
# the 128-wide lane dim).
# ----------------------------------------------------------------------------
def make_cell_kernel(plan, c, h, w, n, bm, apply_pre):
    nhw = n * h * w

    def roll_cols(x, k):
        # y[:, j] = x[:, (j - k) mod nhw]; wrapped lanes are always masked below.
        return pltpu.roll(x, k % nhw, 1)

    def dag_and_store(s0, s1, meta_ref, out_ref):
        negm_l = meta_ref[0 * c:1 * c, :]
        negm_r = meta_ref[1 * c:2 * c, :]
        negm_u = meta_ref[2 * c:3 * c, :]
        negm_d = meta_ref[3 * c:4 * c, :]
        one_l = meta_ref[4 * c:5 * c, :]
        one_r = meta_ref[5 * c:6 * c, :]
        one_u = meta_ref[6 * c:7 * c, :]
        one_d = meta_ref[7 * c:8 * c, :]
        inv_cnt = meta_ref[8 * c:9 * c, :]

        states = [s0, s1]
        wcache = {}   # W-direction rolled views, shared between max/avg pools of a state

        def wviews(idx):
            if idx not in wcache:
                x = states[idx]
                wcache[idx] = (roll_cols(x, 1), roll_cols(x, -1))
            return wcache[idx]

        def max_pool3(idx):
            # separable 3x3 max, stride 1, pad 1 (masked lanes contribute -inf)
            x = states[idx]
            xl, xr = wviews(idx)
            mw = jnp.maximum(x, jnp.maximum(xl + negm_l, xr + negm_r))
            mu = roll_cols(mw, w)
            md = roll_cols(mw, -w)
            return jnp.maximum(mw, jnp.maximum(mu + negm_u, md + negm_d))

        def avg_pool3(idx):
            # separable 3x3 sum, then multiply by 1/valid-count
            x = states[idx]
            xl, xr = wviews(idx)
            sw = x + xl * one_l + xr * one_r
            su = roll_cols(sw, w)
            sd = roll_cols(sw, -w)
            return (sw + su * one_u + sd * one_d) * inv_cnt

        for step_ops in plan:
            acc = None
            for (j, prim) in step_ops:
                if prim == 'skip_connect':
                    v = states[j]
                elif prim == 'max_pool_3x3':
                    v = max_pool3(j)
                elif prim == 'avg_pool_3x3':
                    v = avg_pool3(j)
                else:
                    # TODO(synk): sep_conv_3x3/5x5 and dil_conv_3x3/5x5 primitives are
                    # not implemented (unused by the chosen cell_arch).
                    raise NotImplementedError(prim)
                acc = v if acc is None else acc + v
            if acc is None:                      # robustness: step with no branches
                acc = jnp.zeros_like(s1)
            states.append(acc)

        # Channel concat realized as slab-by-slab tile-aligned stores (no temporary).
        for k in range(bm):
            out_ref[k * c:(k + 1) * c, :] = states[len(states) - bm + k]

    if apply_pre:
        def kernel(x_ref, w_ref, scale_ref, bias_ref, meta_ref, out_ref):
            # ReLU -> both 1x1 convs in ONE MXU pass (block-diagonal weight) -> BN
            x = jnp.maximum(x_ref[...], 0.0)                         # (C_pp+C_p, N*HW)
            s_all = jnp.dot(w_ref[...], x, preferred_element_type=jnp.float32)
            s_all = s_all * scale_ref[...] + bias_ref[...]           # (2C, N*HW)
            dag_and_store(s_all[:c], s_all[c:2 * c], meta_ref, out_ref)
    else:
        def kernel(xpp_ref, xp_ref, w_ref, scale_ref, bias_ref, meta_ref, out_ref):
            # pre_preprocess skipped (C_prev_prev == C_out): s0 is the raw input.
            s0 = xpp_ref[...]
            xp = jnp.maximum(xp_ref[...], 0.0)
            s1 = jnp.dot(w_ref[...], xp, preferred_element_type=jnp.float32)
            s1 = s1 * scale_ref[...] + bias_ref[...]
            dag_and_store(s0, s1, meta_ref, out_ref)

    return kernel


# ----------------------------------------------------------------------------
# Cell forward (wrapper glue; matches PyTorch Cell.forward semantics)
# ----------------------------------------------------------------------------
def cell_forward(prev_prev_nchw, prev_nchw, params, cell_arch, steps,
                 block_multiplier, c_out, downup_sample):
    # TODO(synk): bilinear F.interpolate resampling (downup_sample != 0 or spatial
    # mismatch) is not implemented; the chosen config keeps spatial sizes equal so
    # that branch is skipped, matching the PyTorch control flow exactly.
    assert downup_sample == 0
    assert prev_prev_nchw.shape[2:] == prev_nchw.shape[2:]

    n, c_pp, h, w = prev_prev_nchw.shape
    c_p = prev_nchw.shape[1]
    nhw = n * h * w
    c_total = block_multiplier * c_out
    apply_pre = (c_pp != c_out)

    # NCHW -> (C, N*H*W): batch folded into the 128-wide lane dim (tiny transpose
    # done once by XLA in the wrapper; the kernel then sees lane-dense slabs only).
    x_pp = jnp.transpose(prev_prev_nchw, (1, 0, 2, 3)).reshape(c_pp, nhw)
    x_p = jnp.transpose(prev_nchw, (1, 0, 2, 3)).reshape(c_p, nhw)

    meta = jnp.asarray(build_pool_meta(n, c_out, h, w))   # baked at trace time

    w_pp, sc_pp, b_pp = params['pre_preprocess']
    w_p, sc_p, b_p = params['preprocess']

    plan = build_plan(cell_arch, steps)
    kernel = make_cell_kernel(plan, c_out, h, w, n, block_multiplier, apply_pre)

    if apply_pre:
        # Merge the two preprocess 1x1 convs into one MXU pass: block-diagonal weight
        # on the channel-concatenated input.  (Fine while 2C and C_pp+C_p stay under
        # a single MXU tile; split back into two dots if they ever exceed it.)
        w_cat = jnp.zeros((2 * c_out, c_pp + c_p), jnp.float32)
        w_cat = w_cat.at[:c_out, :c_pp].set(w_pp.T)
        w_cat = w_cat.at[c_out:, c_pp:].set(w_p.T)
        scale_cat = jnp.concatenate([sc_pp, sc_p]).reshape(2 * c_out, 1)
        bias_cat = jnp.concatenate([b_pp, b_p]).reshape(2 * c_out, 1)
        x_cat = jnp.concatenate([x_pp, x_p], axis=0)      # (C_pp + C_p, N*HW)
        inputs = (x_cat, w_cat, scale_cat, bias_cat, meta)
    else:
        inputs = (x_pp, x_p, jnp.transpose(w_p),
                  sc_p.reshape(c_out, 1), b_p.reshape(c_out, 1), meta)

    # Single gridless invocation: whole arrays live in VMEM, the output is one
    # lane-dense (C_total, N*HW) slab written with unmasked full-width stores.
    # TODO(synk): at realistic Auto-DeepLab sizes (HW ~ 128^2, C_total ~100+) add an
    # H-tiled grid axis with a 1-row halo and an explicit vmem_limit_bytes so the
    # working set stays under v7x's 64 MiB VMEM.
    out = pl.pallas_call(
        kernel,
        out_shape=jax.ShapeDtypeStruct((c_total, nhw), jnp.float32),
    )(*inputs)

    concat_nchw = out.reshape(c_total, n, h, w).transpose(1, 0, 2, 3)
    return prev_nchw, concat_nchw


# ----------------------------------------------------------------------------
# Pure-JAX reference (for correctness check only)
# ----------------------------------------------------------------------------
def ref_cell(prev_prev, prev, params, cell_arch, steps, block_multiplier, c_out):
    def rcbn(x, w, scale, bias):
        xr = jnp.maximum(x, 0.0)
        y = jnp.einsum('nchw,cf->nfhw', xr, w)
        return y * scale[None, :, None, None] + bias[None, :, None, None]

    pad = [(0, 0), (0, 0), (1, 1), (1, 1)]

    def maxpool(x):
        return lax.reduce_window(x, -jnp.inf, lax.max, (1, 1, 3, 3), (1, 1, 1, 1), pad)

    def avgpool(x):
        s = lax.reduce_window(x, 0.0, lax.add, (1, 1, 3, 3), (1, 1, 1, 1), pad)
        c = lax.reduce_window(jnp.ones_like(x), 0.0, lax.add, (1, 1, 3, 3), (1, 1, 1, 1), pad)
        return s / c

    arch = {int(b): PRIMITIVES[int(p)] for b, p in cell_arch}
    s0 = rcbn(prev_prev, *params['pre_preprocess']) if prev_prev.shape[1] != c_out else prev_prev
    s1 = rcbn(prev, *params['preprocess'])
    states = [s0, s1]
    offset = 0
    for _ in range(steps):
        new_states = []
        for j, hstate in enumerate(states):
            bi = offset + j
            if bi in arch:
                p = arch[bi]
                if p == 'skip_connect':
                    new_states.append(hstate)
                elif p == 'max_pool_3x3':
                    new_states.append(maxpool(hstate))
                elif p == 'avg_pool_3x3':
                    new_states.append(avgpool(hstate))
        s = new_states[0]
        for ns in new_states[1:]:
            s = s + ns
        offset += len(states)
        states.append(s)
    return prev, jnp.concatenate(states[-block_multiplier:], axis=1)


# ----------------------------------------------------------------------------
if __name__ == "__main__":
    steps, block_multiplier = 3, 3
    filter_multiplier = 8                      # C_out = 8
    prev_filter_multiplier = 4                 # C_prev = 12
    prev_prev_fmultiplier = 2                  # C_prev_prev = 6
    downup_sample = 0
    c_out = filter_multiplier
    c_prev = block_multiplier * prev_filter_multiplier
    c_prev_prev = block_multiplier * prev_prev_fmultiplier

    # (branch_index, primitive_index): skip / max_pool_3x3 / avg_pool_3x3
    cell_arch = np.array([[0, 3], [1, 1], [2, 2], [3, 3], [5, 1], [6, 3]], dtype=np.int32)

    n, h, w = 2, 8, 8                          # N*H*W = 128 -> lane-dense slabs
    key = jax.random.PRNGKey(0)
    ks = jax.random.split(key, 4)
    prev_prev_input = jax.random.normal(ks[0], (n, c_prev_prev, h, w), jnp.float32)
    prev_input = jax.random.normal(ks[1], (n, c_prev, h, w), jnp.float32)

    def make_rcbn_params(k, cin, cout, eps=1e-5):
        kw, kg, kb, km, kv = jax.random.split(k, 5)
        wgt = jax.random.normal(kw, (cin, cout), jnp.float32) * 0.1
        gamma = 1.0 + 0.1 * jax.random.normal(kg, (cout,), jnp.float32)
        beta = 0.1 * jax.random.normal(kb, (cout,), jnp.float32)
        mean = 0.1 * jax.random.normal(km, (cout,), jnp.float32)
        var = 1.0 + 0.1 * jax.random.uniform(kv, (cout,), jnp.float32)
        scale = gamma / jnp.sqrt(var + eps)
        bias = beta - mean * scale
        return wgt, scale, bias

    params = {
        'pre_preprocess': make_rcbn_params(ks[2], c_prev_prev, c_out),
        'preprocess': make_rcbn_params(ks[3], c_prev, c_out),
    }

    # One jitted dispatch for the whole forward (layout plumbing + weight merge + kernel).
    fwd = jax.jit(functools.partial(
        cell_forward, cell_arch=cell_arch, steps=steps,
        block_multiplier=block_multiplier, c_out=c_out,
        downup_sample=downup_sample))

    prev_out, concat_feature = fwd(prev_prev_input, prev_input, params)
    jax.block_until_ready((prev_out, concat_feature))

    ref_prev, ref_concat = ref_cell(
        prev_prev_input, prev_input, params, cell_arch, steps, block_multiplier, c_out)
    assert concat_feature.shape == (n, block_multiplier * c_out, h, w)
    assert np.allclose(np.asarray(prev_out), np.asarray(ref_prev), rtol=1e-4, atol=1e-4)
    assert np.allclose(np.asarray(concat_feature), np.asarray(ref_concat), rtol=1e-4, atol=1e-4)

    print("KERNEL_OK")
</pallas_src>

<mosaic_0001>
module attributes {stable_mosaic.version = 11 : i64} {
  func.func @kernel(%arg0: memref<18x128xf32, #tpu.memory_space<vmem>>, %arg1: memref<16x18xf32, #tpu.memory_space<vmem>>, %arg2: memref<16x1xf32, #tpu.memory_space<vmem>>, %arg3: memref<16x1xf32, #tpu.memory_space<vmem>>, %arg4: memref<72x128xf32, #tpu.memory_space<vmem>>, %arg5: memref<24x128xf32, #tpu.memory_space<vmem>>) attributes {dimension_semantics = [], scalar_prefetch = 0 : i64, scratch_operands = 0 : i64, tpu.core_type = #tpu.core_type<tc>} {
    %c0 = arith.constant 0 : index
    %c0_0 = arith.constant 0 : index
    %0 = vector.load %arg0[%c0, %c0_0] : memref<18x128xf32, #tpu.memory_space<vmem>>, vector<18x128xf32>
    %cst = arith.constant 0.000000e+00 : f32
    %1 = vector.broadcast %cst : f32 to vector<18x128xf32>
    %2 = arith.maximumf %0, %1 : vector<18x128xf32>
    %c0_1 = arith.constant 0 : index
    %c0_2 = arith.constant 0 : index
    %3 = vector.load %arg1[%c0_1, %c0_2] : memref<16x18xf32, #tpu.memory_space<vmem>>, vector<16x18xf32>
    %cst_3 = arith.constant dense<0.000000e+00> : vector<16x128xf32>
    %4 = tpu.matmul %3, %2, %cst_3 {dimension_numbers = #tpu.dot_dimension_numbers<[1], [0], [0], [1], [0, 0, 1, 1], [], []>} : vector<16x18xf32>, vector<18x128xf32>, vector<16x128xf32> -> vector<16x128xf32>
    %c0_4 = arith.constant 0 : index
    %c0_5 = arith.constant 0 : index
    %5 = vector.load %arg2[%c0_4, %c0_5] : memref<16x1xf32, #tpu.memory_space<vmem>>, vector<16x1xf32>
    %6 = vector.broadcast %5 : vector<16x1xf32> to vector<16x128xf32>
    %7 = arith.mulf %4, %6 : vector<16x128xf32>
    %c0_6 = arith.constant 0 : index
    %c0_7 = arith.constant 0 : index
    %8 = vector.load %arg3[%c0_6, %c0_7] : memref<16x1xf32, #tpu.memory_space<vmem>>, vector<16x1xf32>
    %9 = vector.broadcast %8 : vector<16x1xf32> to vector<16x128xf32>
    %10 = arith.addf %7, %9 : vector<16x128xf32>
    %11 = vector.extract_strided_slice %10 {offsets = [0, 0], sizes = [8, 128], strides = [1, 1]} : vector<16x128xf32> to vector<8x128xf32>
    %12 = vector.extract_strided_slice %10 {offsets = [8, 0], sizes = [8, 128], strides = [1, 1]} : vector<16x128xf32> to vector<8x128xf32>
    %c0_8 = arith.constant 0 : index
    %c0_9 = arith.constant 0 : index
    %13 = vector.load %arg4[%c0_8, %c0_9] : memref<72x128xf32, #tpu.memory_space<vmem>>, vector<8x128xf32>
    %c8 = arith.constant 8 : index
    %c0_10 = arith.constant 0 : index
    %14 = vector.load %arg4[%c8, %c0_10] : memref<72x128xf32, #tpu.memory_space<vmem>>, vector<8x128xf32>
    %c16 = arith.constant 16 : index
    %c0_11 = arith.constant 0 : index
    %15 = vector.load %arg4[%c16, %c0_11] : memref<72x128xf32, #tpu.memory_space<vmem>>, vector<8x128xf32>
    %c24 = arith.constant 24 : index
    %c0_12 = arith.constant 0 : index
    %16 = vector.load %arg4[%c24, %c0_12] : memref<72x128xf32, #tpu.memory_space<vmem>>, vector<8x128xf32>
    %c32 = arith.constant 32 : index
    %c0_13 = arith.constant 0 : index
    %17 = vector.load %arg4[%c32, %c0_13] : memref<72x128xf32, #tpu.memory_space<vmem>>, vector<8x128xf32>
    %c40 = arith.constant 40 : index
    %c0_14 = arith.constant 0 : index
    %18 = vector.load %arg4[%c40, %c0_14] : memref<72x128xf32, #tpu.memory_space<vmem>>, vector<8x128xf32>
    %c48 = arith.constant 48 : index
    %c0_15 = arith.constant 0 : index
    %19 = vector.load %arg4[%c48, %c0_15] : memref<72x128xf32, #tpu.memory_space<vmem>>, vector<8x128xf32>
    %c56 = arith.constant 56 : index
    %c0_16 = arith.constant 0 : index
    %20 = vector.load %arg4[%c56, %c0_16] : memref<72x128xf32, #tpu.memory_space<vmem>>, vector<8x128xf32>
    %c64 = arith.constant 64 : index
    %c0_17 = arith.constant 0 : index
    %21 = vector.load %arg4[%c64, %c0_17] : memref<72x128xf32, #tpu.memory_space<vmem>>, vector<8x128xf32>
    %c1_i32 = arith.constant 1 : i32
    %22 = tpu.dynamic_rotate %12 by %c1_i32 dim 1 : vector<8x128xf32>, i32 -> vector<8x128xf32>
    %c127_i32 = arith.constant 127 : i32
    %23 = tpu.dynamic_rotate %12 by %c127_i32 dim 1 : vector<8x128xf32>, i32 -> vector<8x128xf32>
    %24 = arith.addf %22, %13 : vector<8x128xf32>
    %25 = arith.addf %23, %14 : vector<8x128xf32>
    %26 = arith.maximumf %24, %25 : vector<8x128xf32>
    %27 = arith.maximumf %12, %26 : vector<8x128xf32>
    %c8_i32 = arith.constant 8 : i32
    %28 = tpu.dynamic_rotate %27 by %c8_i32 dim 1 : vector<8x128xf32>, i32 -> vector<8x128xf32>
    %c120_i32 = arith.constant 120 : i32
    %29 = tpu.dynamic_rotate %27 by %c120_i32 dim 1 : vector<8x128xf32>, i32 -> vector<8x128xf32>
    %30 = arith.addf %28, %15 : vector<8x128xf32>
    %31 = arith.addf %29, %16 : vector<8x128xf32>
    %32 = arith.maximumf %30, %31 : vector<8x128xf32>
    %33 = arith.maximumf %27, %32 : vector<8x128xf32>
    %34 = arith.addf %11, %33 : vector<8x128xf32>
    %c1_i32_18 = arith.constant 1 : i32
    %35 = tpu.dynamic_rotate %11 by %c1_i32_18 dim 1 : vector<8x128xf32>, i32 -> vector<8x128xf32>
    %c127_i32_19 = arith.constant 127 : i32
    %36 = tpu.dynamic_rotate %11 by %c127_i32_19 dim 1 : vector<8x128xf32>, i32 -> vector<8x128xf32>
    %37 = arith.mulf %35, %17 : vector<8x128xf32>
    %38 = arith.addf %11, %37 : vector<8x128xf32>
    %39 = arith.mulf %36, %18 : vector<8x128xf32>
    %40 = arith.addf %38, %39 : vector<8x128xf32>
    %c8_i32_20 = arith.constant 8 : i32
    %41 = tpu.dynamic_rotate %40 by %c8_i32_20 dim 1 : vector<8x128xf32>, i32 -> vector<8x128xf32>
    %c120_i32_21 = arith.constant 120 : i32
    %42 = tpu.dynamic_rotate %40 by %c120_i32_21 dim 1 : vector<8x128xf32>, i32 -> vector<8x128xf32>
    %43 = arith.mulf %41, %19 : vector<8x128xf32>
    %44 = arith.addf %40, %43 : vector<8x128xf32>
    %45 = arith.mulf %42, %20 : vector<8x128xf32>
    %46 = arith.addf %44, %45 : vector<8x128xf32>
    %47 = arith.mulf %46, %21 : vector<8x128xf32>
    %48 = arith.addf %47, %12 : vector<8x128xf32>
    %49 = arith.addf %35, %13 : vector<8x128xf32>
    %50 = arith.addf %36, %14 : vector<8x128xf32>
    %51 = arith.maximumf %49, %50 : vector<8x128xf32>
    %52 = arith.maximumf %11, %51 : vector<8x128xf32>
    %c8_i32_22 = arith.constant 8 : i32
    %53 = tpu.dynamic_rotate %52 by %c8_i32_22 dim 1 : vector<8x128xf32>, i32 -> vector<8x128xf32>
    %c120_i32_23 = arith.constant 120 : i32
    %54 = tpu.dynamic_rotate %52 by %c120_i32_23 dim 1 : vector<8x128xf32>, i32 -> vector<8x128xf32>
    %55 = arith.addf %53, %15 : vector<8x128xf32>
    %56 = arith.addf %54, %16 : vector<8x128xf32>
    %57 = arith.maximumf %55, %56 : vector<8x128xf32>
    %58 = arith.maximumf %52, %57 : vector<8x128xf32>
    %59 = arith.addf %58, %12 : vector<8x128xf32>
    %c0_24 = arith.constant 0 : index
    %c0_25 = arith.constant 0 : index
    %60 = vector.load %arg5[%c0_24, %c0_25] : memref<24x128xf32, #tpu.memory_space<vmem>>, vector<8x128xf32>
    tpu.vector_store %arg5[%c0_24, %c0_25], %34 {strides = array<i32>} : memref<24x128xf32, #tpu.memory_space<vmem>>, vector<8x128xf32>,
    %c8_26 = arith.constant 8 : index
    %c0_27 = arith.constant 0 : index
    %61 = vector.load %arg5[%c8_26, %c0_27] : memref<24x128xf32, #tpu.memory_space<vmem>>, vector<8x128xf32>
    tpu.vector_store %arg5[%c8_26, %c0_27], %48 {strides = array<i32>} : memref<24x128xf32, #tpu.memory_space<vmem>>, vector<8x128xf32>,
    %c16_28 = arith.constant 16 : index
    %c0_29 = arith.constant 0 : index
    %62 = vector.load %arg5[%c16_28, %c0_29] : memref<24x128xf32, #tpu.memory_space<vmem>>, vector<8x128xf32>
    tpu.vector_store %arg5[%c16_28, %c0_29], %59 {strides = array<i32>} : memref<24x128xf32, #tpu.memory_space<vmem>>, vector<8x128xf32>,
    return
  }
}

</mosaic_0001>

<llo_original>
// kernel: cell_forward.1
$region0: #{cell_forward.1}
  #allocation0 [shape = 'u32[]', space=smem, size = 0x4, offset = 0x4, fixed_abs, tag = 'smem constant byte address 0x4 - core index']
  #allocation1 [shape = 'u32[144,128]{1,0:T(1,128)}', space=vmem, size = 0x12000, scoped, tag = 'internal scratch']
  %s0 = inlined_call_operand.vmem [shape: f32[18,128], index: 0, kind: input, shape index: {}]
  %s1 = inlined_call_operand.vmem [shape: f32[16,18], index: 1, kind: input, shape index: {}]
  %s2 = inlined_call_operand.vmem [shape: f32[16,1], index: 2, kind: input, shape index: {}]
  %s3 = inlined_call_operand.vmem [shape: f32[16,1], index: 3, kind: input, shape index: {}]
  %s4 = inlined_call_operand.vmem [shape: f32[72,128], index: 4, kind: input, shape index: {}]
  %s5 = inlined_call_operand.vmem [shape: f32[24,128], index: 5, kind: output, shape index: {}]
  %s6 = sld [smem:[#allocation0]]
  $region30: #{cell_forward.1} parent=0
    _
  %s8 = ssub.s32 1, %s6
  %s9 = scalar_select 0, %s8, %s6
  // Predicated region
  $region2: #{cell_forward.1} parent=0 // pred_check
    _
  $region3: #{cell_forward.1} parent=0 // pred_check_branch
    %11 = sbr.rel (0) target = $region5
  $region4: #{cell_forward.1} parent=0 // pred_region
    _
  $region5: #{cell_forward.1} parent=0 // pred_fallthru
    _
  // Predicated region
  $region6: #{cell_forward.1} parent=0 // pred_check
    _
  $region7: #{cell_forward.1} parent=0 // pred_check_branch
    %13 = sbr.rel (0) target = $region9
  $region8: #{cell_forward.1} parent=0 // pred_region
    _
  $region9: #{cell_forward.1} parent=0 // pred_fallthru
    _
  // Predicated region
  $region10: #{cell_forward.1} parent=0 // pred_check
    _
  $region11: #{cell_forward.1} parent=0 // pred_check_branch
    %15 = sbr.rel (0) target = $region13
  $region12: #{cell_forward.1} parent=0 // pred_region
    _
  $region13: #{cell_forward.1} parent=0 // pred_fallthru
    _
  // Predicated region
  $region14: #{cell_forward.1} parent=0 // pred_check
    _
  $region15: #{cell_forward.1} parent=0 // pred_check_branch
    %17 = sbr.rel (0) target = $region17
  $region16: #{cell_forward.1} parent=0 // pred_region
    _
  $region17: #{cell_forward.1} parent=0 // pred_fallthru
    _
  // Predicated region
  $region18: #{cell_forward.1} parent=0 // pred_check
    _
  $region19: #{cell_forward.1} parent=0 // pred_check_branch
    %19 = sbr.rel (0) target = $region21
  $region20: #{cell_forward.1} parent=0 // pred_region
    _
  $region21: #{cell_forward.1} parent=0 // pred_fallthru
    _
  %v20 = vld [vmem:[%s0] sm:$0xff]
  %v21 = vld [vmem:[%s0 + $0x8] sm:$0xff]
  %v22 = vld [vmem:[%s0 + $0x10] sm:$0x3]
  %v23 = vmax.f32 %v20, 0.0
  %v24 = vmax.f32 %v21, 0.0
  %v25 = vmax.f32 %v22, 0.0
  %v26 = vld [vmem:[%s1] sm:$0xff]
  %v27 = vld [vmem:[%s1 + $0x8] sm:$0xff]
  %vm28 = vcmask 146432
  %v30 = vsel %vm28, %v26, 0
  %v33 = vsel %vm28, %v27, 0
  %vm35 = vcmask 1041408
  %v37 = vsel %vm35, %v25, 0
  %39 = vmatprep.subr.mxu0 0.0
  %40 = vmatpush1.msra.mxu0 0.0
  %41 = vmatprep.subr.mxu0 0.0
  %42 = vmatpush1.msra.mxu0 0.0
  %43 = vmatprep.subr.mxu0 0.0
  %44 = vmatpush1.msra.mxu0 0.0
  %45 = vmatprep.subr.mxu0 0.0
  %46 = vmatpush1.msra.mxu0 0.0
  %47 = vmatprep.subr.mxu0 0.0
  %48 = vmatpush1.msra.mxu0 0.0
  %49 = vmatprep.subr.mxu0 0.0
  %50 = vmatpush1.msra.mxu0 0.0
  %51 = vmatprep.subr.mxu0 0.0
  %52 = vmatpush1.msra.mxu0 0.0
  %53 = vmatprep.subr.mxu0 0.0
  %54 = vmatpush1.msra.mxu0 0.0
  %55 = vmatprep.subr.mxu0 0.0
  %56 = vmatpush1.msra.mxu0 0.0
  %57 = vmatprep.subr.mxu0 0.0
  %58 = vmatpush1.msra.mxu0 0.0
  %59 = vmatprep.subr.mxu0 0.0
  %60 = vmatpush1.msra.mxu0 0.0
  %61 = vmatprep.subr.mxu0 0.0
  %62 = vmatpush1.msra.mxu0 0.0
  %63 = vmatprep.subr.mxu0 0.0
  %64 = vmatpush1.msra.mxu0 0.0
  %65 = vmatprep.subr.mxu0 0.0
  %66 = vmatpush1.msra.mxu0 %v37
  %67 = vmatprep.subr.mxu0 0.0
  %68 = vmatpush1.msra.mxu0 %v24
  %69 = vmatprep.subr.mxu0 0.0
  %70 = vmatpush1.msra.mxu0 %v23
  %71 = vmatprep.subr.mxu0 0.0
  %72 = vmatpush2.msra.mxu0 0.0
  %73 = vmatprep.subr.mxu0 0.0
  %74 = vmatpush2.msra.mxu0 0.0
  %75 = vmatprep.subr.mxu0 0.0
  %76 = vmatpush2.msra.mxu0 0.0
  %77 = vmatprep.subr.mxu0 0.0
  %78 = vmatpush2.msra.mxu0 0.0
  %79 = vmatprep.subr.mxu0 0.0
  %80 = vmatpush2.msra.mxu0 0.0
  %81 = vmatprep.subr.mxu0 0.0
  %82 = vmatpush2.msra.mxu0 0.0
  %83 = vmatprep.subr.mxu0 0.0
  %84 = vmatpush2.msra.mxu0 0.0
  %85 = vmatprep.subr.mxu0 0.0
  %86 = vmatpush2.msra.mxu0 0.0
  %87 = vmatprep.subr.mxu0 0.0
  %88 = vmatpush2.msra.mxu0 0.0
  %89 = vmatprep.subr.mxu0 0.0
  %90 = vmatpush2.msra.mxu0 0.0
  %91 = vmatprep.subr.mxu0 0.0
  %92 = vmatpush2.msra.mxu0 0.0
  %93 = vmatprep.subr.mxu0 0.0
  %94 = vmatpush2.msra.mxu0 0.0
  %95 = vmatprep.subr.mxu0 0.0
  %96 = vmatpush2.msra.mxu0 0.0
  %97 = vmatprep.subr.mxu0 0.0
  %98 = vmatpush2.msra.mxu0 0.0
  %99 = vmatprep.subr.mxu0 0.0
  %100 = vmatpush2.msra.mxu0 0.0
  %101 = vmatprep.subr.mxu0 0.0
  %102 = vmatpush2.msra.mxu0 0.0
  %103 = vmatprep.mubr.f32.mxu0 0.0
  %104 = vmatmul.mubr.f32.gmra.mxu0 %v30
  %v105 = vpop.f32.mrf.mxu0
  %v106 = vadd.f32 0.0, %v105
  %v107 = vpop.f32.mrf.mxu0
  %108 = vmatprep.mubr.f32.mxu0 0.0
  %109 = vmatmul.mubr.f32.gmra.mxu0 %v33
  %v110 = vpop.f32.mrf.mxu0
  %v111 = vadd.f32 0.0, %v110
  %v112 = vpop.f32.mrf.mxu0
  %113 = vdwg.mxu0
  %v114 = vld [vmem:[%s2] sm:$0xff]
  %v115 = vld [vmem:[%s2 + $0x8] sm:$0xff]
  %117 = vset.pattern.permute.xlu0 0
  %118 = vperm.xlu0 %117, %v114
  %v119 = vpop.permute.xlu0 %118
  %122 = vset.pattern.permute.xlu0 0
  %123 = vperm.xlu0 %122, %v115
  %v124 = vpop.permute.xlu0 %123
  %v126 = vmul.f32 %v106, %v119
  %v127 = vmul.f32 %v111, %v124
  %v128 = vld [vmem:[%s3] sm:$0xff]
  %v129 = vld [vmem:[%s3 + $0x8] sm:$0xff]
  %131 = vset.pattern.permute.xlu0 0
  %132 = vperm.xlu0 %131, %v128
  %v133 = vpop.permute.xlu0 %132
  %136 = vset.pattern.permute.xlu0 0
  %137 = vperm.xlu0 %136, %v129
  %v138 = vpop.permute.xlu0 %137
  %v140 = vadd.f32 %v126, %v133
  %v141 = vadd.f32 %v127, %v138
  %v142 = vld [vmem:[%s4] sm:$0xff]
  %v143 = vld [vmem:[%s4 + $0x8] sm:$0xff]
  %v144 = vld [vmem:[%s4 + $0x10] sm:$0xff]
  %v145 = vld [vmem:[%s4 + $0x18] sm:$0xff]
  %v146 = vld [vmem:[%s4 + $0x20] sm:$0xff]
  %v147 = vld [vmem:[%s4 + $0x28] sm:$0xff]
  %v148 = vld [vmem:[%s4 + $0x30] sm:$0xff]
  %v149 = vld [vmem:[%s4 + $0x38] sm:$0xff]
  %v150 = vld [vmem:[%s4 + $0x40] sm:$0xff]
  %151 = vrot.lane.b32.xlu0 %v141, 1
  %v152 = vpop.permute.xlu0 %151
  %153 = vrot.lane.b32.xlu0 %v141, 127
  %v154 = vpop.permute.xlu0 %153
  %v155 = vadd.f32 %v152, %v142
  %v156 = vadd.f32 %v154, %v143
  %v157 = vmax.f32 %v155, %v156
  %v158 = vmax.f32 %v141, %v157
  %159 = vrot.lane.b32.xlu0 %v158, 8
  %v160 = vpop.permute.xlu0 %159
  %161 = vrot.lane.b32.xlu0 %v158, 120
  %v162 = vpop.permute.xlu0 %161
  %v163 = vadd.f32 %v160, %v144
  %v164 = vadd.f32 %v162, %v145
  %v165 = vmax.f32 %v163, %v164
  %v166 = vmax.f32 %v158, %v165
  %v167 = vadd.f32 %v140, %v166
  %168 = vrot.lane.b32.xlu0 %v140, 1
  %v169 = vpop.permute.xlu0 %168
  %170 = vrot.lane.b32.xlu0 %v140, 127
  %v171 = vpop.permute.xlu0 %170
  %v172 = vmul.f32 %v169, %v146
  %v173 = vadd.f32 %v140, %v172
  %v174 = vmul.f32 %v171, %v147
  %v175 = vadd.f32 %v173, %v174
  %176 = vrot.lane.b32.xlu0 %v175, 8
  %v177 = vpop.permute.xlu0 %176
  %178 = vrot.lane.b32.xlu0 %v175, 120
  %v179 = vpop.permute.xlu0 %178
  %v180 = vmul.f32 %v177, %v148
  %v181 = vadd.f32 %v175, %v180
  %v182 = vmul.f32 %v179, %v149
  %v183 = vadd.f32 %v181, %v182
  %v184 = vmul.f32 %v183, %v150
  %v185 = vadd.f32 %v184, %v141
  %v186 = vadd.f32 %v169, %v142
  %v187 = vadd.f32 %v171, %v143
  %v188 = vmax.f32 %v186, %v187
  %v189 = vmax.f32 %v140, %v188
  %190 = vrot.lane.b32.xlu0 %v189, 8
  %v191 = vpop.permute.xlu0 %190
  %192 = vrot.lane.b32.xlu0 %v189, 120
  %v193 = vpop.permute.xlu0 %192
  %v194 = vadd.f32 %v191, %v144
  %v195 = vadd.f32 %v193, %v145
  %v196 = vmax.f32 %v194, %v195
  %v197 = vmax.f32 %v189, %v196
  %v198 = vadd.f32 %v197, %v141
  %199 = vst [vmem:[%s5] sm:$0xff] %v167
  %200 = vst [vmem:[%s5 + $0x8] sm:$0xff] %v185
  %201 = vst [vmem:[%s5 + $0x10] sm:$0xff] %v198
  // Predicated region
  $region22: #{cell_forward.1} parent=0 // pred_check
    _
  $region23: #{cell_forward.1} parent=0 // pred_check_branch
    %203 = sbr.rel (0) target = $region25
  $region24: #{cell_forward.1} parent=0 // pred_region
    _
  $region25: #{cell_forward.1} parent=0 // pred_fallthru
    _
  // Predicated region
  $region26: #{cell_forward.1} parent=0 // pred_check
    _
  $region27: #{cell_forward.1} parent=0 // pred_check_branch
    %205 = sbr.rel (0) target = $region29
  $region28: #{cell_forward.1} parent=0 // pred_region
    _
  $region29: #{cell_forward.1} parent=0 // pred_fallthru
    _

</llo_original>
